<compile_context>
chip_gen: v7x
topology: tpu7x:2x2x1
jax: 0.10.0
libtpu: 0.0.40
codegen_flags: <defaults>
</compile_context>

<pallas_src>
import functools

import jax
import jax.numpy as jnp
from jax.experimental import pallas as pl
from jax.experimental.pallas import tpu as pltpu


_INV_SQRT2 = 0.7071067811865476
# Abramowitz & Stegun 7.1.26 erf polynomial constants (max abs err ~1.5e-7).
_P = 0.3275911
_A1, _A2, _A3, _A4, _A5 = (0.254829592, -0.284496736, 1.421413741,
                           -1.453152027, 1.061405429)


def _gelu_exact(x):
    """0.5*x*(1+erf(x/sqrt(2))), matching PyTorch nn.GELU() (approximate='none')."""
    z = jnp.abs(x) * _INV_SQRT2
    t = 1.0 / (1.0 + _P * z)
    poly = ((((_A5 * t + _A4) * t + _A3) * t + _A2) * t + _A1) * t
    erf_abs = 1.0 - poly * jnp.exp(-z * z)          # exp -> EUP (free slot)
    erf = jnp.where(x < 0, -erf_abs, erf_abs)       # single select
    return (0.5 * x) * (1.0 + erf)


def unit_tcn_kernel(xcol_ref, w1_ref, b1_ref, w2_ref, b2_ref, out_ref, *,
                    compute_dtype):
    # xcol_ref: (K*C_in, B*L)  im2col block, already in compute_dtype, lane-dense
    # w1_ref:   (C_out, K*C_in) conv1 weight (row = k*C_in + c), compute_dtype
    # b1_ref:   (C_out, 1)      f32
    # w2_ref:   (C_out, C_out)  1x1 conv weight, compute_dtype
    # b2_ref:   (C_out, 1)      f32
    # out_ref:  (C_out, B*L)
    h = jnp.dot(w1_ref[...], xcol_ref[...],
                preferred_element_type=jnp.float32) + b1_ref[...]
    h = _gelu_exact(h)                               # f32 on VPU/EUP
    y = jnp.dot(w2_ref[...], h.astype(compute_dtype),
                preferred_element_type=jnp.float32) + b2_ref[...]
    out_ref[...] = y.astype(out_ref.dtype)


def _pick_block(N, Lpad, target_lanes):
    """Largest B dividing N with B*Lpad <= target_lanes, keeping grid >= 2 (v7x)."""
    best = 1
    for B in range(1, N + 1):
        if N % B or B * Lpad > target_lanes:
            continue
        if N >= 2 and N // B < 2:
            continue
        best = max(best, B)
    return best


def unit_tcn_forward(x, w1, b1, w2, b2, *, stride=1, block_n=None,
                     compute_dtype=jnp.float32, target_lanes=4096):
    """x: (N, C_in, L); w1: (C_out, C_in, K); b1: (C_out,);
    w2: (C_out, C_out) or (C_out, C_out, 1); b2: (C_out,)."""
    if stride != 1:
        # TODO(synk): stride > 1 not implemented (module default stride=1 only).
        raise NotImplementedError("unit_tcn Pallas kernel supports stride=1 only")

    N, C_in, L = x.shape
    C_out, _, K = w1.shape
    pad = (K - 1) // 2
    Lpad = ((L + 127) // 128) * 128                  # lane-dense time axis

    # ---- wrapper-side layout plumbing (cheap XLA ops, keeps kernel relayout-free)
    # zero-pad: conv halo on both sides + round time up to 128-multiple
    xp = jnp.pad(x, ((0, 0), (0, 0), (pad, pad + (Lpad - L))))   # (N, C_in, Lpad+K-1)
    # im2col: row index k*C_in + c  ->  xp[n, c, k:k+Lpad]
    taps = jnp.stack([xp[:, :, k:k + Lpad] for k in range(K)], axis=1)  # (N,K,C_in,Lpad)
    xcol = taps.reshape(N, K * C_in, Lpad)
    xcol = jnp.transpose(xcol, (1, 0, 2)).reshape(K * C_in, N * Lpad)
    xcol = xcol.astype(compute_dtype)

    w1f = jnp.transpose(w1, (0, 2, 1)).reshape(C_out, K * C_in).astype(compute_dtype)
    w2f = w2.reshape(C_out, C_out).astype(compute_dtype)
    b1c = b1.reshape(C_out, 1).astype(jnp.float32)
    b2c = b2.reshape(C_out, 1).astype(jnp.float32)

    B = block_n if block_n is not None else _pick_block(N, Lpad, target_lanes)
    assert N % B == 0
    BL = B * Lpad
    grid = (N // B,)

    kernel = functools.partial(unit_tcn_kernel, compute_dtype=compute_dtype)

    y = pl.pallas_call(
        kernel,
        out_shape=jax.ShapeDtypeStruct((C_out, N * Lpad), x.dtype),
        grid=grid,
        in_specs=[
            pl.BlockSpec((K * C_in, BL), lambda n: (0, n)),   # im2col block
            pl.BlockSpec((C_out, K * C_in), lambda n: (0, 0)),
            pl.BlockSpec((C_out, 1), lambda n: (0, 0)),
            pl.BlockSpec((C_out, C_out), lambda n: (0, 0)),
            pl.BlockSpec((C_out, 1), lambda n: (0, 0)),
        ],
        out_specs=pl.BlockSpec((C_out, BL), lambda n: (0, n)),
        compiler_params=pltpu.CompilerParams(
            dimension_semantics=("parallel",),
            vmem_limit_bytes=32 * 1024 * 1024,
        ),
    )(xcol, w1f, b1c, w2f, b2c)

    # (C_out, N*Lpad) -> (N, C_out, L)  (wrapper-side reshape/transpose + crop)
    y = y.reshape(C_out, N, Lpad)[:, :, :L]
    return jnp.transpose(y, (1, 0, 2))


def unit_tcn_ref(x, w1, b1, w2, b2):
    """Pure-JAX reference mirroring PyTorch:
    Conv1d(k, pad=(k-1)//2, stride=1) -> GELU(exact) -> Conv1d(1)."""
    C_out, C_in, K = w1.shape
    pad = (K - 1) // 2
    N, _, L = x.shape
    xp = jnp.pad(x, ((0, 0), (0, 0), (pad, pad)))
    y = jnp.zeros((N, C_out, L), jnp.float32)
    for k in range(K):  # cross-correlation, same as torch Conv1d
        y = y + jnp.einsum('oc,nct->not', w1[:, :, k], xp[:, :, k:k + L])
    y = y + b1[None, :, None]
    y = 0.5 * y * (1.0 + jax.scipy.special.erf(y * _INV_SQRT2))   # exact GELU
    z = jnp.einsum('oc,nct->not', w2.reshape(C_out, C_out), y) + b2[None, :, None]
    return z


if __name__ == "__main__":
    # Small shapes: N=8, C_in=16, C_out=32, L=128 (lane-aligned), kernel_size=9.
    # Auto block picks B=4 -> B*L=512 lanes/step, grid=(2,) (both v7x TCs busy).
    N, C_in, C_out, L, K = 8, 16, 32, 128, 9

    key = jax.random.PRNGKey(0)
    kx, k1, k2, k3, k4 = jax.random.split(key, 5)

    x = jax.random.normal(kx, (N, C_in, L), dtype=jnp.float32)
    s1 = 1.0 / (C_in * K) ** 0.5
    s2 = 1.0 / C_out ** 0.5
    w1 = s1 * jax.random.uniform(k1, (C_out, C_in, K), jnp.float32, -1.0, 1.0)
    b1 = s1 * jax.random.uniform(k2, (C_out,), jnp.float32, -1.0, 1.0)
    w2 = s2 * jax.random.uniform(k3, (C_out, C_out), jnp.float32, -1.0, 1.0)
    b2 = s2 * jax.random.uniform(k4, (C_out,), jnp.float32, -1.0, 1.0)

    ref = unit_tcn_ref(x, w1, b1, w2, b2)

    # f32 path: tight correctness check.
    out = unit_tcn_forward(x, w1, b1, w2, b2, compute_dtype=jnp.float32)
    out = jax.block_until_ready(out)
    assert out.shape == (N, C_out, L), out.shape
    max_err = float(jnp.max(jnp.abs(out - ref)))
    assert jnp.allclose(out, ref, rtol=5e-4, atol=5e-4), max_err

    # bf16-to-MXU path (recommended on v5e/v6e/v7x): loose tolerance.
    out_bf16 = unit_tcn_forward(x, w1, b1, w2, b2, compute_dtype=jnp.bfloat16)
    out_bf16 = jax.block_until_ready(out_bf16)
    max_err_bf16 = float(jnp.max(jnp.abs(out_bf16 - ref)))
    assert jnp.allclose(out_bf16, ref, rtol=1e-1, atol=1e-1), max_err_bf16

    print("KERNEL_OK")
</pallas_src>

<mosaic_0001>
module attributes {stable_mosaic.version = 11 : i64} {
  func.func @unit_tcn_kernel(%arg0: i32, %arg1: memref<144x512xf32, #tpu.memory_space<vmem>>, %arg2: memref<32x144xf32, #tpu.memory_space<vmem>>, %arg3: memref<32x1xf32, #tpu.memory_space<vmem>>, %arg4: memref<32x32xf32, #tpu.memory_space<vmem>>, %arg5: memref<32x1xf32, #tpu.memory_space<vmem>>, %arg6: memref<32x512xf32, #tpu.memory_space<vmem>>) attributes {dimension_semantics = [#tpu.dimension_semantics<parallel>], iteration_bounds = array<i64: 2>, scalar_prefetch = 0 : i64, scratch_operands = 0 : i64, tpu.core_type = #tpu.core_type<tc>, window_params = [{transform_indices = @transform_0, window_bounds = array<i64: 144, 512>}, {pipeline_mode = #tpu.pipeline_mode<synchronous>, transform_indices = @transform_1, window_bounds = array<i64: 32, 144>}, {pipeline_mode = #tpu.pipeline_mode<synchronous>, transform_indices = @transform_2, window_bounds = array<i64: 32, 1>}, {pipeline_mode = #tpu.pipeline_mode<synchronous>, transform_indices = @transform_3, window_bounds = array<i64: 32, 32>}, {pipeline_mode = #tpu.pipeline_mode<synchronous>, transform_indices = @transform_4, window_bounds = array<i64: 32, 1>}, {transform_indices = @transform_5, window_bounds = array<i64: 32, 512>}]} {
    %c0 = arith.constant 0 : index
    %c0_0 = arith.constant 0 : index
    %0 = vector.load %arg2[%c0, %c0_0] : memref<32x144xf32, #tpu.memory_space<vmem>>, vector<32x144xf32>
    %c0_1 = arith.constant 0 : index
    %c0_2 = arith.constant 0 : index
    %1 = vector.load %arg1[%c0_1, %c0_2] : memref<144x512xf32, #tpu.memory_space<vmem>>, vector<144x512xf32>
    %cst = arith.constant dense<0.000000e+00> : vector<32x512xf32>
    %2 = tpu.matmul %0, %1, %cst {dimension_numbers = #tpu.dot_dimension_numbers<[1], [0], [0], [1], [0, 0, 1, 1], [], []>} : vector<32x144xf32>, vector<144x512xf32>, vector<32x512xf32> -> vector<32x512xf32>
    %c0_3 = arith.constant 0 : index
    %c0_4 = arith.constant 0 : index
    %3 = vector.load %arg3[%c0_3, %c0_4] : memref<32x1xf32, #tpu.memory_space<vmem>>, vector<32x1xf32>
    %4 = vector.broadcast %3 : vector<32x1xf32> to vector<32x512xf32>
    %5 = arith.addf %2, %4 : vector<32x512xf32>
    %6 = math.absf %5 : vector<32x512xf32>
    %cst_5 = arith.constant 0.707106769 : f32
    %7 = vector.broadcast %cst_5 : f32 to vector<32x512xf32>
    %8 = arith.mulf %6, %7 : vector<32x512xf32>
    %cst_6 = arith.constant 0.327591091 : f32
    %9 = vector.broadcast %cst_6 : f32 to vector<32x512xf32>
    %10 = arith.mulf %9, %8 : vector<32x512xf32>
    %cst_7 = arith.constant 1.000000e+00 : f32
    %11 = vector.broadcast %cst_7 : f32 to vector<32x512xf32>
    %12 = arith.addf %11, %10 : vector<32x512xf32>
    %cst_8 = arith.constant 1.000000e+00 : f32
    %13 = vector.broadcast %cst_8 : f32 to vector<32x512xf32>
    %14 = arith.divf %13, %12 : vector<32x512xf32>
    %cst_9 = arith.constant 1.06140542 : f32
    %15 = vector.broadcast %cst_9 : f32 to vector<32x512xf32>
    %16 = arith.mulf %15, %14 : vector<32x512xf32>
    %cst_10 = arith.constant -1.45315206 : f32
    %17 = vector.broadcast %cst_10 : f32 to vector<32x512xf32>
    %18 = arith.addf %16, %17 : vector<32x512xf32>
    %19 = arith.mulf %18, %14 : vector<32x512xf32>
    %cst_11 = arith.constant 1.42141378 : f32
    %20 = vector.broadcast %cst_11 : f32 to vector<32x512xf32>
    %21 = arith.addf %19, %20 : vector<32x512xf32>
    %22 = arith.mulf %21, %14 : vector<32x512xf32>
    %cst_12 = arith.constant -0.284496725 : f32
    %23 = vector.broadcast %cst_12 : f32 to vector<32x512xf32>
    %24 = arith.addf %22, %23 : vector<32x512xf32>
    %25 = arith.mulf %24, %14 : vector<32x512xf32>
    %cst_13 = arith.constant 0.254829586 : f32
    %26 = vector.broadcast %cst_13 : f32 to vector<32x512xf32>
    %27 = arith.addf %25, %26 : vector<32x512xf32>
    %28 = arith.mulf %27, %14 : vector<32x512xf32>
    %cst_14 = arith.constant 0.000000e+00 : f32
    %29 = vector.broadcast %cst_14 : f32 to vector<32x512xf32>
    %30 = arith.subf %29, %8 : vector<32x512xf32>
    %31 = arith.mulf %30, %8 : vector<32x512xf32>
    %32 = math.exp %31 : vector<32x512xf32>
    %33 = arith.mulf %28, %32 : vector<32x512xf32>
    %cst_15 = arith.constant 1.000000e+00 : f32
    %34 = vector.broadcast %cst_15 : f32 to vector<32x512xf32>
    %35 = arith.subf %34, %33 : vector<32x512xf32>
    %cst_16 = arith.constant 0.000000e+00 : f32
    %36 = vector.broadcast %cst_16 : f32 to vector<32x512xf32>
    %37 = arith.cmpf olt, %5, %36 : vector<32x512xf32>
    %cst_17 = arith.constant 0.000000e+00 : f32
    %38 = vector.broadcast %cst_17 : f32 to vector<32x512xf32>
    %39 = arith.subf %38, %35 : vector<32x512xf32>
    %40 = arith.select %37, %39, %35 : vector<32x512xi1>, vector<32x512xf32>
    %cst_18 = arith.constant 5.000000e-01 : f32
    %41 = vector.broadcast %cst_18 : f32 to vector<32x512xf32>
    %42 = arith.mulf %41, %5 : vector<32x512xf32>
    %cst_19 = arith.constant 1.000000e+00 : f32
    %43 = vector.broadcast %cst_19 : f32 to vector<32x512xf32>
    %44 = arith.addf %43, %40 : vector<32x512xf32>
    %45 = arith.mulf %42, %44 : vector<32x512xf32>
    %c0_20 = arith.constant 0 : index
    %c0_21 = arith.constant 0 : index
    %46 = vector.load %arg4[%c0_20, %c0_21] : memref<32x32xf32, #tpu.memory_space<vmem>>, vector<32x32xf32>
    %cst_22 = arith.constant dense<0.000000e+00> : vector<32x512xf32>
    %47 = tpu.matmul %46, %45, %cst_22 {dimension_numbers = #tpu.dot_dimension_numbers<[1], [0], [0], [1], [0, 0, 1, 1], [], []>} : vector<32x32xf32>, vector<32x512xf32>, vector<32x512xf32> -> vector<32x512xf32>
    %c0_23 = arith.constant 0 : index
    %c0_24 = arith.constant 0 : index
    %48 = vector.load %arg5[%c0_23, %c0_24] : memref<32x1xf32, #tpu.memory_space<vmem>>, vector<32x1xf32>
    %49 = vector.broadcast %48 : vector<32x1xf32> to vector<32x512xf32>
    %50 = arith.addf %47, %49 : vector<32x512xf32>
    %c0_25 = arith.constant 0 : index
    %c0_26 = arith.constant 0 : index
    %51 = vector.load %arg6[%c0_25, %c0_26] : memref<32x512xf32, #tpu.memory_space<vmem>>, vector<32x512xf32>
    tpu.vector_store %arg6[%c0_25, %c0_26], %50 {strides = array<i32>} : memref<32x512xf32, #tpu.memory_space<vmem>>, vector<32x512xf32>,
    return
  }
  func.func @transform_0(%arg0: i32) -> (i32, i32) {
    %c0_i32 = arith.constant 0 : i32
    %c0_i32_0 = arith.constant 0 : i32
    return %c0_i32, %arg0 : i32, i32
  }
  func.func @transform_1(%arg0: i32) -> (i32, i32) {
    %c0_i32 = arith.constant 0 : i32
    %c0_i32_0 = arith.constant 0 : i32
    %c0_i32_1 = arith.constant 0 : i32
    return %c0_i32, %c0_i32_0 : i32, i32
  }
  func.func @transform_2(%arg0: i32) -> (i32, i32) {
    %c0_i32 = arith.constant 0 : i32
    %c0_i32_0 = arith.constant 0 : i32
    %c0_i32_1 = arith.constant 0 : i32
    return %c0_i32, %c0_i32_0 : i32, i32
  }
  func.func @transform_3(%arg0: i32) -> (i32, i32) {
    %c0_i32 = arith.constant 0 : i32
    %c0_i32_0 = arith.constant 0 : i32
    %c0_i32_1 = arith.constant 0 : i32
    return %c0_i32, %c0_i32_0 : i32, i32
  }
  func.func @transform_4(%arg0: i32) -> (i32, i32) {
    %c0_i32 = arith.constant 0 : i32
    %c0_i32_0 = arith.constant 0 : i32
    %c0_i32_1 = arith.constant 0 : i32
    return %c0_i32, %c0_i32_0 : i32, i32
  }
  func.func @transform_5(%arg0: i32) -> (i32, i32) {
    %c0_i32 = arith.constant 0 : i32
    %c0_i32_0 = arith.constant 0 : i32
    return %c0_i32, %arg0 : i32, i32
  }
}

</mosaic_0001>

<llo_original>
// kernel: tpu_custom_call.1
$region0: #{tpu_custom_call.1}
  #allocation0 [shape = 'u32[]', space=smem, size = 0x4, offset = 0x4, fixed_abs, tag = 'smem constant byte address 0x4 - core index']
  #allocation1 [shape = 'u32[144,128]{1,0:T(1,128)}', space=vmem, size = 0x12000, scoped, tag = 'internal scratch']
  %s0 = inlined_call_operand.hbm [shape: f32[144,1024], index: 0, kind: input, shape index: {}]
  %s1 = inlined_call_operand.vmem [shape: f32[32,144], index: 1, kind: input, shape index: {}]
  %s2 = inlined_call_operand.vmem [shape: f32[32,1], index: 2, kind: input, shape index: {}]
  %s3 = inlined_call_operand.hbm [shape: f32[32,32], index: 3, kind: input, shape index: {}]
  %s4 = inlined_call_operand.vmem [shape: f32[32,1], index: 4, kind: input, shape index: {}]
  %s5 = inlined_call_operand.hbm [shape: f32[32,1024], index: 5, kind: output, shape index: {}]
  %s6 = sld [smem:[#allocation0]]
  $region61: #{tpu_custom_call.1} parent=0
    _
  %s8 = ssub.s32 1, %s6
  %s9 = scalar_select 0, %s8, %s6
  $region1: #{tpu_custom_call.1} parent=0
    #allocation2 [shape = 'u8[589824]{0}', space=vmem, size = 0x90000, scoped, tag = 'input window, operand 0']
    #allocation3 [shape = 's32[2]{0}', space=sflag, size = 0x8, scoped, tag = 'scoped memory for tpu_custom_call.1']
    #allocation4 [shape = 's32[2]{0}', space=sflag, size = 0x8, scoped, tag = 'scoped memory for tpu_custom_call.1']
    #allocation5 [shape = 'u8[16384]{0}', space=vmem, size = 0x4000, scoped, tag = 'input window, operand 3, single buffered']
    #allocation6 [shape = 's32[1]{0}', space=sflag, size = 0x4, scoped, tag = 'scoped memory for tpu_custom_call.1']
    #allocation7 [shape = 'u8[131072]{0}', space=vmem, size = 0x20000, scoped, tag = 'output window, operand 0']
    %10 = vsyncpa [#allocation3], 0
    %s11 = scalar_lea.sflag [#allocation3], 1
    %12 = vsyncpa %s11, 0
    %13 = vsyncpa [#allocation6], 0
    %14 = vsyncpa [#allocation4], 0
    %s15 = scalar_lea.sflag [#allocation4], 1
    %16 = vsyncpa %s15, 0
    loop: start=0, step=1, limit=4
    $region2: #{tpu_custom_call.1} parent=1 // loop_pre_header
      _
    $region3: #{tpu_custom_call.1} parent=1 // loop_header
      %s18 = sphi 0, %s22
      %p19 = scmp.ge.s32.totalorder %s18, 4
      %s28 = sphi 0, %s30
      %s31 = sphi 0, %s28
      %s32 = sphi 0, %s31
      %s48 = sphi 0, %s32
      %s52 = sphi 0, %s52
      %s54 = sphi 0, %s52
      %s55 = sphi 0, %s54
      %s69 = sphi 0, %s55
      %s73 = sphi 0, %s73
      %s75 = sphi 0, %s73
      %s76 = sphi 0, %s75
      %s90 = sphi 0, %s76
      %s94 = sphi 0, %s94
      %s96 = sphi 0, %s94
      %s97 = sphi 0, %s96
      %s111 = sphi 0, %s97
      %s115 = sphi 0, %s115
      %s117 = sphi 0, %s115
      %s118 = sphi 0, %s117
      %s132 = sphi 0, %s118
      %s138 = sphi 0, %s140
      %s141 = sphi 0, %s138
      %s142 = sphi 0, %s141
      %s158 = sphi 0, %s142
    $region4: #{tpu_custom_call.1} parent=1 // loop_header_branch
      %21 = sbr.rel (%p19) target = $region8
    $region5: #{tpu_custom_call.1} parent=1 // loop_body
      %s23 = ssub.s32 %s18, 1
      %s24 = ssub.s32 %s18, 2
      %s25 = sadd.s32 %s18, 1
      %s26 = ssub.s32 %s18, %s25
      %p27 = scmp.eq.s32.totalorder %s26, 0
      %s29 = sadd.s32 %s28, 1
      %s30 = scalar_select %p27, %s28, %s29
      %p33 = pneg %p27
      %p34 = scmp.eq.s32.totalorder %s18, 1
      %p35 = por %p33, %p34
      %p36 = scmp.ne.s32.totalorder %s28, %s31
      %p37 = scmp.eq.s32.totalorder %s18, 0
      %p38 = por %p36, %p37
      %p39 = scmp.ne.s32.totalorder %s28, %s31
      %p40 = scmp.eq.s32.totalorder %s23, 1
      %p41 = por %p39, %p40
      %p42 = scmp.ne.s32.totalorder %s31, %s32
      %p43 = scmp.eq.s32.totalorder %s23, 0
      %p44 = por %p42, %p43
      %p45 = scmp.ne.s32.totalorder %s31, %s32
      %p46 = scmp.eq.s32.totalorder %s24, 1
      %p47 = por %p45, %p46
      %p49 = scmp.ne.s32.totalorder %s32, %s48
      %p50 = scmp.eq.s32.totalorder %s24, 0
      %p51 = por %p49, %p50
      %s53 = sadd.s32 %s52, 1
      %p56 = scmp.eq.s32.totalorder %s18, 1
      %p57 = scmp.ne.s32.totalorder %s52, %s54
      %p58 = scmp.eq.s32.totalorder %s18, 0
      %p59 = por %p57, %p58
      %p60 = scmp.ne.s32.totalorder %s52, %s54
      %p61 = scmp.eq.s32.totalorder %s23, 1
      %p62 = por %p60, %p61
      %p63 = scmp.ne.s32.totalorder %s54, %s55
      %p64 = scmp.eq.s32.totalorder %s23, 0
      %p65 = por %p63, %p64
      %p66 = scmp.ne.s32.totalorder %s54, %s55
      %p67 = scmp.eq.s32.totalorder %s24, 1
      %p68 = por %p66, %p67
      %p70 = scmp.ne.s32.totalorder %s55, %s69
      %p71 = scmp.eq.s32.totalorder %s24, 0
      %p72 = por %p70, %p71
      %s74 = sadd.s32 %s73, 1
      %p77 = scmp.eq.s32.totalorder %s18, 1
      %p78 = scmp.ne.s32.totalorder %s73, %s75
      %p79 = scmp.eq.s32.totalorder %s18, 0
      %p80 = por %p78, %p79
      %p81 = scmp.ne.s32.totalorder %s73, %s75
      %p82 = scmp.eq.s32.totalorder %s23, 1
      %p83 = por %p81, %p82
      %p84 = scmp.ne.s32.totalorder %s75, %s76
      %p85 = scmp.eq.s32.totalorder %s23, 0
      %p86 = por %p84, %p85
      %p87 = scmp.ne.s32.totalorder %s75, %s76
      %p88 = scmp.eq.s32.totalorder %s24, 1
      %p89 = por %p87, %p88
      %p91 = scmp.ne.s32.totalorder %s76, %s90
      %p92 = scmp.eq.s32.totalorder %s24, 0
      %p93 = por %p91, %p92
      %s95 = sadd.s32 %s94, 1
      %p98 = scmp.eq.s32.totalorder %s18, 1
      %p99 = scmp.ne.s32.totalorder %s94, %s96
      %p100 = scmp.eq.s32.totalorder %s18, 0
      %p101 = por %p99, %p100
      %p102 = scmp.ne.s32.totalorder %s94, %s96
      %p103 = scmp.eq.s32.totalorder %s23, 1
      %p104 = por %p102, %p103
      %p105 = scmp.ne.s32.totalorder %s96, %s97
      %p106 = scmp.eq.s32.totalorder %s23, 0
      %p107 = por %p105, %p106
      %p108 = scmp.ne.s32.totalorder %s96, %s97
      %p109 = scmp.eq.s32.totalorder %s24, 1
      %p110 = por %p108, %p109
      %p112 = scmp.ne.s32.totalorder %s97, %s111
      %p113 = scmp.eq.s32.totalorder %s24, 0
      %p114 = por %p112, %p113
      %s116 = sadd.s32 %s115, 1
      %p119 = scmp.eq.s32.totalorder %s18, 1
      %p120 = scmp.ne.s32.totalorder %s115, %s117
      %p121 = scmp.eq.s32.totalorder %s18, 0
      %p122 = por %p120, %p121
      %p123 = scmp.ne.s32.totalorder %s115, %s117
      %p124 = scmp.eq.s32.totalorder %s23, 1
      %p125 = por %p123, %p124
      %p126 = scmp.ne.s32.totalorder %s117, %s118
      %p127 = scmp.eq.s32.totalorder %s23, 0
      %p128 = por %p126, %p127
      %p129 = scmp.ne.s32.totalorder %s117, %s118
      %p130 = scmp.eq.s32.totalorder %s24, 1
      %p131 = por %p129, %p130
      %p133 = scmp.ne.s32.totalorder %s118, %s132
      %p134 = scmp.eq.s32.totalorder %s24, 0
      %p135 = por %p133, %p134
      %s136 = ssub.s32 %s18, %s25
      %p137 = scmp.eq.s32.totalorder %s136, 0
      %s139 = sadd.s32 %s138, 1
      %s140 = scalar_select %p137, %s138, %s139
      %p143 = pneg %p137
      %p144 = scmp.eq.s32.totalorder %s18, 1
      %p145 = por %p143, %p144
      %p146 = scmp.ne.s32.totalorder %s138, %s141
      %p147 = scmp.eq.s32.totalorder %s18, 0
      %p148 = por %p146, %p147
      %p149 = scmp.ne.s32.totalorder %s138, %s141
      %p150 = scmp.eq.s32.totalorder %s23, 1
      %p151 = por %p149, %p150
      %p152 = scmp.ne.s32.totalorder %s141, %s142
      %p153 = scmp.eq.s32.totalorder %s23, 0
      %p154 = por %p152, %p153
      %p155 = scmp.ne.s32.totalorder %s141, %s142
      %p156 = scmp.eq.s32.totalorder %s24, 1
      %p157 = por %p155, %p156
      %p159 = scmp.ne.s32.totalorder %s142, %s158
      %p160 = scmp.eq.s32.totalorder %s24, 0
      %p161 = por %p159, %p160
      %p162 = scmp.le.s32.totalorder 1, %s18
      %p163 = scmp.lt.s32.totalorder %s18, 3
      %p164 = pnand %p162, %p163
      %p165 = pneg %p164
      // Predicated region
      $region9: #{tpu_custom_call.1} parent=5 // pred_check
        _
      $region10: #{tpu_custom_call.1} parent=5 // pred_check_branch
        %167 = sbr.rel (%p164) target = $region12
      $region11: #{tpu_custom_call.1} parent=5 // pred_region
        %s168 = ssub.s32 %s18, 1
        // Predicated region
        $region13: #{tpu_custom_call.1} parent=11 // pred_check
          %p169 = pneg %p65
        $region14: #{tpu_custom_call.1} parent=11 // pred_check_branch
          %171 = sbr.rel (%p169) target = $region16
        $region15: #{tpu_custom_call.1} parent=11 // pred_region
          _
        $region16: #{tpu_custom_call.1} parent=11 // pred_fallthru
          _
        // Predicated region
        $region17: #{tpu_custom_call.1} parent=11 // pred_check
          %p172 = pneg %p86
        $region18: #{tpu_custom_call.1} parent=11 // pred_check_branch
          %174 = sbr.rel (%p172) target = $region20
        $region19: #{tpu_custom_call.1} parent=11 // pred_region
          _
        $region20: #{tpu_custom_call.1} parent=11 // pred_fallthru
          _
        // Predicated region
        $region21: #{tpu_custom_call.1} parent=11 // pred_check
          %p175 = pneg %p107
        $region22: #{tpu_custom_call.1} parent=11 // pred_check_branch
          %177 = sbr.rel (%p175) target = $region24
        $region23: #{tpu_custom_call.1} parent=11 // pred_region
          %s179 = ssub.s32 512, 512
          %180 = vsyncadd [#allocation6], %s179
          %s181 = sshll.u32 [#allocation5], 4
          %s182 = int_to_ptr.vmem [resolvable:$true] %s181
          %187 = dma.hbm_to_vmem [thread:$0]  %s3, 512, %s182, [#allocation6], 128, 128, 8
        $region24: #{tpu_custom_call.1} parent=11 // pred_fallthru
          _
        // Predicated region
        $region25: #{tpu_custom_call.1} parent=11 // pred_check
          %p188 = pneg %p128
        $region26: #{tpu_custom_call.1} parent=11 // pred_check_branch
          %190 = sbr.rel (%p188) target = $region28
        $region27: #{tpu_custom_call.1} parent=11 // pred_region
          _
        $region28: #{tpu_custom_call.1} parent=11 // pred_fallthru
          _
      $region12: #{tpu_custom_call.1} parent=5 // pred_fallthru
        _
      %p191 = scmp.lt.s32.totalorder %s18, 2
      // Predicated region
      $region29: #{tpu_custom_call.1} parent=5 // pred_check
        %p192 = pneg %p191
      $region30: #{tpu_custom_call.1} parent=5 // pred_check_branch
        %194 = sbr.rel (%p192) target = $region32
      $region31: #{tpu_custom_call.1} parent=5 // pred_region
        // Predicated region
        $region33: #{tpu_custom_call.1} parent=31 // pred_check
          %p195 = pneg %p38
        $region34: #{tpu_custom_call.1} parent=31 // pred_check_branch
          %197 = sbr.rel (%p195) target = $region36
        $region35: #{tpu_custom_call.1} parent=31 // pred_region
          %s198 = sand.u32 %s28, 1
          %s199 = scalar_lea.sflag [#allocation3], %s198
          %s200 = sand.u32 %s28, 1
          %s201 = smul.addr %s200, 576
          %s202 = scalar_lea.vmem [#allocation2], %s201
          %s203 = smul.u32 4, %s18
          %s205 = ssub.s32 9216, 9216
          %206 = vsyncadd %s199, %s205
          %s207 = smul.addr %s203, 128
          %s208 = scalar_lea.hbm %s0, %s207
          %s209 = sshll.u32 %s202, 4
          %s210 = int_to_ptr.vmem [resolvable:$true] %s209
          %215 = dma.hbm_to_vmem [thread:$0]  %s208, 9216, %s210, %s199, 1024, 512, 32
        $region36: #{tpu_custom_call.1} parent=31 // pred_fallthru
          _
      $region32: #{tpu_custom_call.1} parent=5 // pred_fallthru
        _
      %p216 = scmp.le.s32.totalorder 1, %s18
      %p217 = scmp.lt.s32.totalorder %s18, 3
      %p218 = pnand %p216, %p217
      %p219 = pneg %p218
      // Predicated region
      $region37: #{tpu_custom_call.1} parent=5 // pred_check
        _
      $region38: #{tpu_custom_call.1} parent=5 // pred_check_branch
        %221 = sbr.rel (%p218) target = $region40
      $region39: #{tpu_custom_call.1} parent=5 // pred_region
        %s222 = ssub.s32 %s18, 1
        %s223 = sand.u32 %s31, 1
        %s224 = scalar_lea.sflag [#allocation3], %s223
        %s225 = sand.u32 %s31, 1
        %s226 = smul.addr %s225, 576
        %s227 = scalar_lea.vmem [#allocation2], %s226
        // Predicated region
        $region41: #{tpu_custom_call.1} parent=39 // pred_check
          %p228 = pneg %p44
        $region42: #{tpu_custom_call.1} parent=39 // pred_check_branch
          %230 = sbr.rel (%p228) target = $region44
        $region43: #{tpu_custom_call.1} parent=39 // pred_region
          %231 = dma.done %s224, 9216
        $region44: #{tpu_custom_call.1} parent=39 // pred_fallthru
          _
        // Predicated region
        $region45: #{tpu_custom_call.1} parent=39 // pred_check
          %p232 = pneg %p107
        $region46: #{tpu_custom_call.1} parent=39 // pred_check_branch
          %234 = sbr.rel (%p232) target = $region48
        $region47: #{tpu_custom_call.1} parent=39 // pred_region
          %235 = dma.done [#allocation6], 512
        $region48: #{tpu_custom_call.1} parent=39 // pred_fallthru
          _
        %s236 = sand.u32 %s31, 1
        %s237 = scalar_lea.sflag [#allocation3], %s236
        %s238 = sand.u32 %s31, 1
        %s239 = smul.addr %s238, 576
        %s240 = scalar_lea.vmem [#allocation2], %s239
        %p241 = pneg %p44
        %p242 = pneg %p41
        %p243 = pneg %p65
        %p244 = pneg %p62
        %p245 = pneg %p86
        %p246 = pneg %p83
        %p247 = pneg %p107
        %p248 = pneg %p104
        %p249 = pneg %p128
        %p250 = pneg %p125
        %p251 = pneg %p154
        %p252 = pneg %p151
        %s253 = sand.u32 %s141, 1
        %s254 = scalar_lea.sflag [#allocation4], %s253
        %s255 = sand.u32 %s141, 1
        %s256 = smul.addr %s255, 128
        %s257 = scalar_lea.vmem [#allocation7], %s256
        %s258 = smul.u32 4, %s23
        %s259 = smul.u32 4, %s23
        %v260 = vld [vmem:[%s1] sm:$0xff]
        %v261 = vld [vmem:[%s1 + $0x8] sm:$0xff]
        %v262 = vld [vmem:[%s1 + $0x10] sm:$0xff]
        %v263 = vld [vmem:[%s1 + $0x18] sm:$0xff]
        %v264 = vld [vmem:[%s1 + $0x20] sm:$0xff]
        %v265 = vld [vmem:[%s1 + $0x28] sm:$0xff]
        %v266 = vld [vmem:[%s1 + $0x30] sm:$0xff]
        %v267 = vld [vmem:[%s1 + $0x38] sm:$0xff]
        %v268 = vld [vmem:[%s227] sm:$0xff]
        %v269 = vld [vmem:[%s227 + $0x8] sm:$0xff]
        %v270 = vld [vmem:[%s227 + $0x10] sm:$0xff]
        %v271 = vld [vmem:[%s227 + $0x18] sm:$0xff]
        %v272 = vld [vmem:[%s227 + $0x20] sm:$0xff]
        %v273 = vld [vmem:[%s227 + $0x28] sm:$0xff]
        %v274 = vld [vmem:[%s227 + $0x30] sm:$0xff]
        %v275 = vld [vmem:[%s227 + $0x38] sm:$0xff]
        %v276 = vld [vmem:[%s227 + $0x40] sm:$0xff]
        %v277 = vld [vmem:[%s227 + $0x48] sm:$0xff]
        %v278 = vld [vmem:[%s227 + $0x50] sm:$0xff]
        %v279 = vld [vmem:[%s227 + $0x58] sm:$0xff]
        %v280 = vld [vmem:[%s227 + $0x60] sm:$0xff]
        %v281 = vld [vmem:[%s227 + $0x68] sm:$0xff]
        %v282 = vld [vmem:[%s227 + $0x70] sm:$0xff]
        %v283 = vld [vmem:[%s227 + $0x78] sm:$0xff]
        %v284 = vld [vmem:[%s227 + $0x80] sm:$0xff]
        %v285 = vld [vmem:[%s227 + $0x88] sm:$0xff]
        %v286 = vld [vmem:[%s227 + $0x90] sm:$0xff]
        %v287 = vld [vmem:[%s227 + $0x98] sm:$0xff]
        %v288 = vld [vmem:[%s227 + $0xa0] sm:$0xff]
        %v289 = vld [vmem:[%s227 + $0xa8] sm:$0xff]
        %v290 = vld [vmem:[%s227 + $0xb0] sm:$0xff]
        %v291 = vld [vmem:[%s227 + $0xb8] sm:$0xff]
        %v292 = vld [vmem:[%s227 + $0xc0] sm:$0xff]
        %v293 = vld [vmem:[%s227 + $0xc8] sm:$0xff]
        %v294 = vld [vmem:[%s227 + $0xd0] sm:$0xff]
        %v295 = vld [vmem:[%s227 + $0xd8] sm:$0xff]
        %v296 = vld [vmem:[%s227 + $0xe0] sm:$0xff]
        %v297 = vld [vmem:[%s227 + $0xe8] sm:$0xff]
        %v298 = vld [vmem:[%s227 + $0xf0] sm:$0xff]
        %v299 = vld [vmem:[%s227 + $0xf8] sm:$0xff]
        %v300 = vld [vmem:[%s227 + $0x100] sm:$0xff]
        %v301 = vld [vmem:[%s227 + $0x108] sm:$0xff]
        %v302 = vld [vmem:[%s227 + $0x110] sm:$0xff]
        %v303 = vld [vmem:[%s227 + $0x118] sm:$0xff]
        %v304 = vld [vmem:[%s227 + $0x120] sm:$0xff]
        %v305 = vld [vmem:[%s227 + $0x128] sm:$0xff]
        %v306 = vld [vmem:[%s227 + $0x130] sm:$0xff]
        %v307 = vld [vmem:[%s227 + $0x138] sm:$0xff]
        %v308 = vld [vmem:[%s227 + $0x140] sm:$0xff]
        %v309 = vld [vmem:[%s227 + $0x148] sm:$0xff]
        %v310 = vld [vmem:[%s227 + $0x150] sm:$0xff]
        %v311 = vld [vmem:[%s227 + $0x158] sm:$0xff]
        %v312 = vld [vmem:[%s227 + $0x160] sm:$0xff]
        %v313 = vld [vmem:[%s227 + $0x168] sm:$0xff]
        %v314 = vld [vmem:[%s227 + $0x170] sm:$0xff]
        %v315 = vld [vmem:[%s227 + $0x178] sm:$0xff]
        %v316 = vld [vmem:[%s227 + $0x180] sm:$0xff]
        %v317 = vld [vmem:[%s227 + $0x188] sm:$0xff]
        %v318 = vld [vmem:[%s227 + $0x190] sm:$0xff]
        %v319 = vld [vmem:[%s227 + $0x198] sm:$0xff]
        %v320 = vld [vmem:[%s227 + $0x1a0] sm:$0xff]
        %v321 = vld [vmem:[%s227 + $0x1a8] sm:$0xff]
        %v322 = vld [vmem:[%s227 + $0x1b0] sm:$0xff]
        %v323 = vld [vmem:[%s227 + $0x1b8] sm:$0xff]
        %v324 = vld [vmem:[%s227 + $0x1c0] sm:$0xff]
        %v325 = vld [vmem:[%s227 + $0x1c8] sm:$0xff]
        %v326 = vld [vmem:[%s227 + $0x1d0] sm:$0xff]
        %v327 = vld [vmem:[%s227 + $0x1d8] sm:$0xff]
        %v328 = vld [vmem:[%s227 + $0x1e0] sm:$0xff]
        %v329 = vld [vmem:[%s227 + $0x1e8] sm:$0xff]
        %v330 = vld [vmem:[%s227 + $0x1f0] sm:$0xff]
        %v331 = vld [vmem:[%s227 + $0x1f8] sm:$0xff]
        %v332 = vld [vmem:[%s227 + $0x200] sm:$0xff]
        %v333 = vld [vmem:[%s227 + $0x208] sm:$0xff]
        %v334 = vld [vmem:[%s227 + $0x210] sm:$0xff]
        %v335 = vld [vmem:[%s227 + $0x218] sm:$0xff]
        %v336 = vld [vmem:[%s227 + $0x220] sm:$0xff]
        %v337 = vld [vmem:[%s227 + $0x228] sm:$0xff]
        %v338 = vld [vmem:[%s227 + $0x230] sm:$0xff]
        %v339 = vld [vmem:[%s227 + $0x238] sm:$0xff]
        %v340 = vld [vmem:[%s2] sm:$0xff]
        %v341 = vld [vmem:[%s2 + $0x8] sm:$0xff]
        %v342 = vld [vmem:[%s2 + $0x10] sm:$0xff]
        %v343 = vld [vmem:[%s2 + $0x18] sm:$0xff]
        %345 = vset.pattern.permute.xlu0 0
        %346 = vperm.xlu0 %345, %v340
        %v347 = vpop.permute.xlu0 %346
        %350 = vset.pattern.permute.xlu0 0
        %351 = vperm.xlu0 %350, %v341
        %v352 = vpop.permute.xlu0 %351
        %355 = vset.pattern.permute.xlu0 0
        %356 = vperm.xlu0 %355, %v342
        %v357 = vpop.permute.xlu0 %356
        %360 = vset.pattern.permute.xlu0 0
        %361 = vperm.xlu0 %360, %v343
        %v362 = vpop.permute.xlu0 %361
        %vm364 = vcmask 130048
        %v366 = vsel %vm364, %v261, 0
        %v369 = vsel %vm364, %v263, 0
        %v372 = vsel %vm364, %v265, 0
        %v375 = vsel %vm364, %v267, 0
        %377 = vmatprep.subr.mxu0 %v269
        %378 = vmatpush1.msra.mxu0 %v268
        %379 = vmatprep.subr.mxu0 %v273
        %380 = vmatpush1.msra.mxu0 %v272
        %381 = vmatprep.subr.mxu0 %v277
        %382 = vmatpush1.msra.mxu0 %v276
        %383 = vmatprep.subr.mxu0 %v281
        %384 = vmatpush1.msra.mxu0 %v280
        %385 = vmatprep.subr.mxu0 %v285
        %386 = vmatpush1.msra.mxu0 %v284
        %387 = vmatprep.subr.mxu0 %v289
        %388 = vmatpush1.msra.mxu0 %v288
        %389 = vmatprep.subr.mxu0 %v293
        %390 = vmatpush1.msra.mxu0 %v292
        %391 = vmatprep.subr.mxu0 %v297
        %392 = vmatpush1.msra.mxu0 %v296
        %393 = vmatprep.subr.mxu0 %v301
        %394 = vmatpush1.msra.mxu0 %v300
        %395 = vmatprep.subr.mxu0 %v305
        %396 = vmatpush1.msra.mxu0 %v304
        %397 = vmatprep.subr.mxu0 %v309
        %398 = vmatpush1.msra.mxu0 %v308
        %399 = vmatprep.subr.mxu0 %v313
        %400 = vmatpush1.msra.mxu0 %v312
        %401 = vmatprep.subr.mxu0 %v317
        %402 = vmatpush1.msra.mxu0 %v316
        %403 = vmatprep.subr.mxu0 %v321
        %404 = vmatpush1.msra.mxu0 %v320
        %405 = vmatprep.subr.mxu0 %v325
        %406 = vmatpush1.msra.mxu0 %v324
        %407 = vmatprep.subr.mxu0 %v329
        %408 = vmatpush1.msra.mxu0 %v328
        %409 = vmatprep.subr.mxu0 %v333
        %410 = vmatpush1.msra.mxu0 %v332
        %411 = vmatprep.subr.mxu0 %v337
        %412 = vmatpush1.msra.mxu0 %v336
        %413 = vmatprep.subr.mxu0 0.0
        %414 = vmatpush1.msra.mxu0 0.0
        %415 = vmatprep.subr.mxu0 0.0
        %416 = vmatpush1.msra.mxu0 0.0
        %417 = vmatprep.subr.mxu0 0.0
        %418 = vmatpush1.msra.mxu0 0.0
        %419 = vmatprep.subr.mxu0 0.0
        %420 = vmatpush1.msra.mxu0 0.0
        %421 = vmatprep.subr.mxu0 0.0
        %422 = vmatpush1.msra.mxu0 0.0
        %423 = vmatprep.subr.mxu0 0.0
        %424 = vmatpush1.msra.mxu0 0.0
        %425 = vmatprep.subr.mxu0 0.0
        %426 = vmatpush1.msra.mxu0 0.0
        %427 = vmatprep.subr.mxu0 0.0
        %428 = vmatpush1.msra.mxu0 0.0
        %429 = vmatprep.subr.mxu0 0.0
        %430 = vmatpush1.msra.mxu0 0.0
        %431 = vmatprep.subr.mxu0 0.0
        %432 = vmatpush1.msra.mxu0 0.0
        %433 = vmatprep.subr.mxu0 0.0
        %434 = vmatpush1.msra.mxu0 0.0
        %435 = vmatprep.subr.mxu0 0.0
        %436 = vmatpush1.msra.mxu0 0.0
        %437 = vmatprep.subr.mxu0 0.0
        %438 = vmatpush1.msra.mxu0 0.0
        %439 = vmatprep.subr.mxu0 0.0
        %440 = vmatpush1.msra.mxu0 0.0
        %441 = vmatprep.mubr.f32.mxu0 %v366
        %442 = vmatmul.mubr.f32.gmra.mrb[0].mxu0 %v260
        %v443 = vpop.f32.mrb[0].mxu0
        %v444 = vadd.f32 %v347, %v443
        %v445 = vpop.f32.mrb[0].mxu0
        %v446 = vadd.f32 %v347, %v445
        %447 = vmatprep.mubr.f32.mxu0 %v369
        %448 = vmatmul.mubr.f32.gmra.mrb[0].mxu0 %v262
        %v449 = vpop.f32.mrb[0].mxu0
        %v450 = vadd.f32 %v352, %v449
        %v451 = vpop.f32.mrb[0].mxu0
        %v452 = vadd.f32 %v352, %v451
        %453 = vmatprep.mubr.f32.mxu0 %v372
        %454 = vmatmul.mubr.f32.gmra.mrb[0].mxu0 %v264
        %v455 = vpop.f32.mrb[0].mxu0
        %v456 = vadd.f32 %v357, %v455
        %v457 = vpop.f32.mrb[0].mxu0
        %v458 = vadd.f32 %v357, %v457
        %459 = vmatprep.mubr.f32.mxu0 %v375
        %460 = vmatmul.mubr.f32.gmra.mrb[0].mxu0 %v266
        %v461 = vpop.f32.mrb[0].mxu0
        %v462 = vadd.f32 %v362, %v461
        %v463 = vpop.f32.mrb[0].mxu0
        %v464 = vadd.f32 %v362, %v463
        %465 = vdwg.mxu0
        %466 = vmatprep.subr.mxu0 %v271
        %467 = vmatpush1.msra.mxu0 %v270
        %468 = vmatprep.subr.mxu0 %v275
        %469 = vmatpush1.msra.mxu0 %v274
        %470 = vmatprep.subr.mxu0 %v279
        %471 = vmatpush1.msra.mxu0 %v278
        %472 = vmatprep.subr.mxu0 %v283
        %473 = vmatpush1.msra.mxu0 %v282
        %474 = vmatprep.subr.mxu0 %v287
        %475 = vmatpush1.msra.mxu0 %v286
        %476 = vmatprep.subr.mxu0 %v291
        %477 = vmatpush1.msra.mxu0 %v290
        %478 = vmatprep.subr.mxu0 %v295
        %479 = vmatpush1.msra.mxu0 %v294
        %480 = vmatprep.subr.mxu0 %v299
        %481 = vmatpush1.msra.mxu0 %v298
        %482 = vmatprep.subr.mxu0 %v303
        %483 = vmatpush1.msra.mxu0 %v302
        %484 = vmatprep.subr.mxu0 %v307
        %485 = vmatpush1.msra.mxu0 %v306
        %486 = vmatprep.subr.mxu0 %v311
        %487 = vmatpush1.msra.mxu0 %v310
        %488 = vmatprep.subr.mxu0 %v315
        %489 = vmatpush1.msra.mxu0 %v314
        %490 = vmatprep.subr.mxu0 %v319
        %491 = vmatpush1.msra.mxu0 %v318
        %492 = vmatprep.subr.mxu0 %v323
        %493 = vmatpush1.msra.mxu0 %v322
        %494 = vmatprep.subr.mxu0 %v327
        %495 = vmatpush1.msra.mxu0 %v326
        %496 = vmatprep.subr.mxu0 %v331
        %497 = vmatpush1.msra.mxu0 %v330
        %498 = vmatprep.subr.mxu0 %v335
        %499 = vmatpush1.msra.mxu0 %v334
        %500 = vmatprep.subr.mxu0 %v339
        %501 = vmatpush1.msra.mxu0 %v338
        %502 = vmatprep.subr.mxu0 0.0
        %503 = vmatpush1.msra.mxu0 0.0
        %504 = vmatprep.subr.mxu0 0.0
        %505 = vmatpush1.msra.mxu0 0.0
        %506 = vmatprep.subr.mxu0 0.0
        %507 = vmatpush1.msra.mxu0 0.0
        %508 = vmatprep.subr.mxu0 0.0
        %509 = vmatpush1.msra.mxu0 0.0
        %510 = vmatprep.subr.mxu0 0.0
        %511 = vmatpush1.msra.mxu0 0.0
        %512 = vmatprep.subr.mxu0 0.0
        %513 = vmatpush1.msra.mxu0 0.0
        %514 = vmatprep.subr.mxu0 0.0
        %515 = vmatpush1.msra.mxu0 0.0
        %516 = vmatprep.subr.mxu0 0.0
        %517 = vmatpush1.msra.mxu0 0.0
        %518 = vmatprep.subr.mxu0 0.0
        %519 = vmatpush1.msra.mxu0 0.0
        %520 = vmatprep.subr.mxu0 0.0
        %521 = vmatpush1.msra.mxu0 0.0
        %522 = vmatprep.subr.mxu0 0.0
        %523 = vmatpush1.msra.mxu0 0.0
        %524 = vmatprep.subr.mxu0 0.0
        %525 = vmatpush1.msra.mxu0 0.0
        %526 = vmatprep.subr.mxu0 0.0
        %527 = vmatpush1.msra.mxu0 0.0
        %528 = vmatprep.subr.mxu0 0.0
        %529 = vmatpush1.msra.mxu0 0.0
        %530 = vmatprep.mubr.f32.mxu0 %v366
        %531 = vmatmul.mubr.f32.gmra.mrb[0].mxu0 %v260
        %v532 = vpop.f32.mrb[0].mxu0
        %v533 = vadd.f32 %v347, %v532
        %v534 = vpop.f32.mrb[0].mxu0
        %v535 = vadd.f32 %v347, %v534
        %536 = vmatprep.mubr.f32.mxu0 %v369
        %537 = vmatmul.mubr.f32.gmra.mrb[0].mxu0 %v262
        %v538 = vpop.f32.mrb[0].mxu0
        %v539 = vadd.f32 %v352, %v538
        %v540 = vpop.f32.mrb[0].mxu0
        %v541 = vadd.f32 %v352, %v540
        %542 = vmatprep.mubr.f32.mxu0 %v372
        %543 = vmatmul.mubr.f32.gmra.mrb[0].mxu0 %v264
        %v544 = vpop.f32.mrb[0].mxu0
        %v545 = vadd.f32 %v357, %v544
        %v546 = vpop.f32.mrb[0].mxu0
        %v547 = vadd.f32 %v357, %v546
        %548 = vmatprep.mubr.f32.mxu0 %v375
        %549 = vmatmul.mubr.f32.gmra.mrb[0].mxu0 %v266
        %v550 = vpop.f32.mrb[0].mxu0
        %v551 = vadd.f32 %v362, %v550
        %v552 = vpop.f32.mrb[0].mxu0
        %v553 = vadd.f32 %v362, %v552
        %554 = vdwg.mxu0
        %v555 = vand.u32 2147483647, %v444
        %v556 = vand.u32 2147483647, %v446
        %v557 = vand.u32 2147483647, %v533
        %v558 = vand.u32 2147483647, %v535
        %v559 = vand.u32 2147483647, %v450
        %v560 = vand.u32 2147483647, %v452
        %v561 = vand.u32 2147483647, %v539
        %v562 = vand.u32 2147483647, %v541
        %v563 = vand.u32 2147483647, %v456
        %v564 = vand.u32 2147483647, %v458
        %v565 = vand.u32 2147483647, %v545
        %v566 = vand.u32 2147483647, %v547
        %v567 = vand.u32 2147483647, %v462
        %v568 = vand.u32 2147483647, %v464
        %v569 = vand.u32 2147483647, %v551
        %v570 = vand.u32 2147483647, %v553
        %v571 = vmul.f32 %v555, 0.70710677
        %v572 = vmul.f32 %v556, 0.70710677
        %v573 = vmul.f32 %v557, 0.70710677
        %v574 = vmul.f32 %v558, 0.70710677
        %v575 = vmul.f32 %v559, 0.70710677
        %v576 = vmul.f32 %v560, 0.70710677
        %v577 = vmul.f32 %v561, 0.70710677
        %v578 = vmul.f32 %v562, 0.70710677
        %v579 = vmul.f32 %v563, 0.70710677
        %v580 = vmul.f32 %v564, 0.70710677
        %v581 = vmul.f32 %v565, 0.70710677
        %v582 = vmul.f32 %v566, 0.70710677
        %v583 = vmul.f32 %v567, 0.70710677
        %v584 = vmul.f32 %v568, 0.70710677
        %v585 = vmul.f32 %v569, 0.70710677
        %v586 = vmul.f32 %v570, 0.70710677
        %v587 = vmul.f32 %v571, 0.3275911
        %v588 = vmul.f32 %v572, 0.3275911
        %v589 = vmul.f32 %v573, 0.3275911
        %v590 = vmul.f32 %v574, 0.3275911
        %v591 = vmul.f32 %v575, 0.3275911
        %v592 = vmul.f32 %v576, 0.3275911
        %v593 = vmul.f32 %v577, 0.3275911
        %v594 = vmul.f32 %v578, 0.3275911
        %v595 = vmul.f32 %v579, 0.3275911
        %v596 = vmul.f32 %v580, 0.3275911
        %v597 = vmul.f32 %v581, 0.3275911
        %v598 = vmul.f32 %v582, 0.3275911
        %v599 = vmul.f32 %v583, 0.3275911
        %v600 = vmul.f32 %v584, 0.3275911
        %v601 = vmul.f32 %v585, 0.3275911
        %v602 = vmul.f32 %v586, 0.3275911
        %v603 = vadd.f32 %v587, 1.0
        %v604 = vadd.f32 %v588, 1.0
        %v605 = vadd.f32 %v589, 1.0
        %v606 = vadd.f32 %v590, 1.0
        %v607 = vadd.f32 %v591, 1.0
        %v608 = vadd.f32 %v592, 1.0
        %v609 = vadd.f32 %v593, 1.0
        %v610 = vadd.f32 %v594, 1.0
        %v611 = vadd.f32 %v595, 1.0
        %v612 = vadd.f32 %v596, 1.0
        %v613 = vadd.f32 %v597, 1.0
        %v614 = vadd.f32 %v598, 1.0
        %v615 = vadd.f32 %v599, 1.0
        %v616 = vadd.f32 %v600, 1.0
        %v617 = vadd.f32 %v601, 1.0
        %v618 = vadd.f32 %v602, 1.0
        %v619 = vrcp.pop %v603
        %v620 = vmul.f32 1.0, %v619
        %v621 = vrcp.pop %v604
        %v622 = vmul.f32 1.0, %v621
        %v623 = vrcp.pop %v605
        %v624 = vmul.f32 1.0, %v623
        %v625 = vrcp.pop %v606
        %v626 = vmul.f32 1.0, %v625
        %v627 = vrcp.pop %v607
        %v628 = vmul.f32 1.0, %v627
        %v629 = vrcp.pop %v608
        %v630 = vmul.f32 1.0, %v629
        %v631 = vrcp.pop %v609
        %v632 = vmul.f32 1.0, %v631
        %v633 = vrcp.pop %v610
        %v634 = vmul.f32 1.0, %v633
        %v635 = vrcp.pop %v611
        %v636 = vmul.f32 1.0, %v635
        %v637 = vrcp.pop %v612
        %v638 = vmul.f32 1.0, %v637
        %v639 = vrcp.pop %v613
        %v640 = vmul.f32 1.0, %v639
        %v641 = vrcp.pop %v614
        %v642 = vmul.f32 1.0, %v641
        %v643 = vrcp.pop %v615
        %v644 = vmul.f32 1.0, %v643
        %v645 = vrcp.pop %v616
        %v646 = vmul.f32 1.0, %v645
        %v647 = vrcp.pop %v617
        %v648 = vmul.f32 1.0, %v647
        %v649 = vrcp.pop %v618
        %v650 = vmul.f32 1.0, %v649
        %v651 = vmul.f32 %v620, 1.0614054
        %v652 = vmul.f32 %v622, 1.0614054
        %v653 = vmul.f32 %v624, 1.0614054
        %v654 = vmul.f32 %v626, 1.0614054
        %v655 = vmul.f32 %v628, 1.0614054
        %v656 = vmul.f32 %v630, 1.0614054
        %v657 = vmul.f32 %v632, 1.0614054
        %v658 = vmul.f32 %v634, 1.0614054
        %v659 = vmul.f32 %v636, 1.0614054
        %v660 = vmul.f32 %v638, 1.0614054
        %v661 = vmul.f32 %v640, 1.0614054
        %v662 = vmul.f32 %v642, 1.0614054
        %v663 = vmul.f32 %v644, 1.0614054
        %v664 = vmul.f32 %v646, 1.0614054
        %v665 = vmul.f32 %v648, 1.0614054
        %v666 = vmul.f32 %v650, 1.0614054
        %v667 = vadd.f32 %v651, -1.4531521
        %v668 = vadd.f32 %v652, -1.4531521
        %v669 = vadd.f32 %v653, -1.4531521
        %v670 = vadd.f32 %v654, -1.4531521
        %v671 = vadd.f32 %v655, -1.4531521
        %v672 = vadd.f32 %v656, -1.4531521
        %v673 = vadd.f32 %v657, -1.4531521
        %v674 = vadd.f32 %v658, -1.4531521
        %v675 = vadd.f32 %v659, -1.4531521
        %v676 = vadd.f32 %v660, -1.4531521
        %v677 = vadd.f32 %v661, -1.4531521
        %v678 = vadd.f32 %v662, -1.4531521
        %v679 = vadd.f32 %v663, -1.4531521
        %v680 = vadd.f32 %v664, -1.4531521
        %v681 = vadd.f32 %v665, -1.4531521
        %v682 = vadd.f32 %v666, -1.4531521
        %v683 = vmul.f32 %v667, %v620
        %v684 = vmul.f32 %v668, %v622
        %v685 = vmul.f32 %v669, %v624
        %v686 = vmul.f32 %v670, %v626
        %v687 = vmul.f32 %v671, %v628
        %v688 = vmul.f32 %v672, %v630
        %v689 = vmul.f32 %v673, %v632
        %v690 = vmul.f32 %v674, %v634
        %v691 = vmul.f32 %v675, %v636
        %v692 = vmul.f32 %v676, %v638
        %v693 = vmul.f32 %v677, %v640
        %v694 = vmul.f32 %v678, %v642
        %v695 = vmul.f32 %v679, %v644
        %v696 = vmul.f32 %v680, %v646
        %v697 = vmul.f32 %v681, %v648
        %v698 = vmul.f32 %v682, %v650
        %v699 = vadd.f32 %v683, 1.4214138
        %v700 = vadd.f32 %v684, 1.4214138
        %v701 = vadd.f32 %v685, 1.4214138
        %v702 = vadd.f32 %v686, 1.4214138
        %v703 = vadd.f32 %v687, 1.4214138
        %v704 = vadd.f32 %v688, 1.4214138
        %v705 = vadd.f32 %v689, 1.4214138
        %v706 = vadd.f32 %v690, 1.4214138
        %v707 = vadd.f32 %v691, 1.4214138
        %v708 = vadd.f32 %v692, 1.4214138
        %v709 = vadd.f32 %v693, 1.4214138
        %v710 = vadd.f32 %v694, 1.4214138
        %v711 = vadd.f32 %v695, 1.4214138
        %v712 = vadd.f32 %v696, 1.4214138
        %v713 = vadd.f32 %v697, 1.4214138
        %v714 = vadd.f32 %v698, 1.4214138
        %v715 = vmul.f32 %v699, %v620
        %v716 = vmul.f32 %v700, %v622
        %v717 = vmul.f32 %v701, %v624
        %v718 = vmul.f32 %v702, %v626
        %v719 = vmul.f32 %v703, %v628
        %v720 = vmul.f32 %v704, %v630
        %v721 = vmul.f32 %v705, %v632
        %v722 = vmul.f32 %v706, %v634
        %v723 = vmul.f32 %v707, %v636
        %v724 = vmul.f32 %v708, %v638
        %v725 = vmul.f32 %v709, %v640
        %v726 = vmul.f32 %v710, %v642
        %v727 = vmul.f32 %v711, %v644
        %v728 = vmul.f32 %v712, %v646
        %v729 = vmul.f32 %v713, %v648
        %v730 = vmul.f32 %v714, %v650
        %v731 = vadd.f32 %v715, -0.28449672
        %v732 = vadd.f32 %v716, -0.28449672
        %v733 = vadd.f32 %v717, -0.28449672
        %v734 = vadd.f32 %v718, -0.28449672
        %v735 = vadd.f32 %v719, -0.28449672
        %v736 = vadd.f32 %v720, -0.28449672
        %v737 = vadd.f32 %v721, -0.28449672
        %v738 = vadd.f32 %v722, -0.28449672
        %v739 = vadd.f32 %v723, -0.28449672
        %v740 = vadd.f32 %v724, -0.28449672
        %v741 = vadd.f32 %v725, -0.28449672
        %v742 = vadd.f32 %v726, -0.28449672
        %v743 = vadd.f32 %v727, -0.28449672
        %v744 = vadd.f32 %v728, -0.28449672
        %v745 = vadd.f32 %v729, -0.28449672
        %v746 = vadd.f32 %v730, -0.28449672
        %v747 = vmul.f32 %v731, %v620
        %v748 = vmul.f32 %v732, %v622
        %v749 = vmul.f32 %v733, %v624
        %v750 = vmul.f32 %v734, %v626
        %v751 = vmul.f32 %v735, %v628
        %v752 = vmul.f32 %v736, %v630
        %v753 = vmul.f32 %v737, %v632
        %v754 = vmul.f32 %v738, %v634
        %v755 = vmul.f32 %v739, %v636
        %v756 = vmul.f32 %v740, %v638
        %v757 = vmul.f32 %v741, %v640
        %v758 = vmul.f32 %v742, %v642
        %v759 = vmul.f32 %v743, %v644
        %v760 = vmul.f32 %v744, %v646
        %v761 = vmul.f32 %v745, %v648
        %v762 = vmul.f32 %v746, %v650
        %v763 = vadd.f32 %v747, 0.2548296
        %v764 = vadd.f32 %v748, 0.2548296
        %v765 = vadd.f32 %v749, 0.2548296
        %v766 = vadd.f32 %v750, 0.2548296
        %v767 = vadd.f32 %v751, 0.2548296
        %v768 = vadd.f32 %v752, 0.2548296
        %v769 = vadd.f32 %v753, 0.2548296
        %v770 = vadd.f32 %v754, 0.2548296
        %v771 = vadd.f32 %v755, 0.2548296
        %v772 = vadd.f32 %v756, 0.2548296
        %v773 = vadd.f32 %v757, 0.2548296
        %v774 = vadd.f32 %v758, 0.2548296
        %v775 = vadd.f32 %v759, 0.2548296
        %v776 = vadd.f32 %v760, 0.2548296
        %v777 = vadd.f32 %v761, 0.2548296
        %v778 = vadd.f32 %v762, 0.2548296
        %v779 = vmul.f32 %v763, %v620
        %v780 = vmul.f32 %v764, %v622
        %v781 = vmul.f32 %v765, %v624
        %v782 = vmul.f32 %v766, %v626
        %v783 = vmul.f32 %v767, %v628
        %v784 = vmul.f32 %v768, %v630
        %v785 = vmul.f32 %v769, %v632
        %v786 = vmul.f32 %v770, %v634
        %v787 = vmul.f32 %v771, %v636
        %v788 = vmul.f32 %v772, %v638
        %v789 = vmul.f32 %v773, %v640
        %v790 = vmul.f32 %v774, %v642
        %v791 = vmul.f32 %v775, %v644
        %v792 = vmul.f32 %v776, %v646
        %v793 = vmul.f32 %v777, %v648
        %v794 = vmul.f32 %v778, %v650
        %v795 = vsub.f32 0.0, %v571
        %v796 = vsub.f32 0.0, %v572
        %v797 = vsub.f32 0.0, %v573
        %v798 = vsub.f32 0.0, %v574
        %v799 = vsub.f32 0.0, %v575
        %v800 = vsub.f32 0.0, %v576
        %v801 = vsub.f32 0.0, %v577
        %v802 = vsub.f32 0.0, %v578
        %v803 = vsub.f32 0.0, %v579
        %v804 = vsub.f32 0.0, %v580
        %v805 = vsub.f32 0.0, %v581
        %v806 = vsub.f32 0.0, %v582
        %v807 = vsub.f32 0.0, %v583
        %v808 = vsub.f32 0.0, %v584
        %v809 = vsub.f32 0.0, %v585
        %v810 = vsub.f32 0.0, %v586
        %v811 = vmul.f32 %v795, %v571
        %v812 = vmul.f32 %v796, %v572
        %v813 = vmul.f32 %v797, %v573
        %v814 = vmul.f32 %v798, %v574
        %v815 = vmul.f32 %v799, %v575
        %v816 = vmul.f32 %v800, %v576
        %v817 = vmul.f32 %v801, %v577
        %v818 = vmul.f32 %v802, %v578
        %v819 = vmul.f32 %v803, %v579
        %v820 = vmul.f32 %v804, %v580
        %v821 = vmul.f32 %v805, %v581
        %v822 = vmul.f32 %v806, %v582
        %v823 = vmul.f32 %v807, %v583
        %v824 = vmul.f32 %v808, %v584
        %v825 = vmul.f32 %v809, %v585
        %v826 = vmul.f32 %v810, %v586
        %v827 = vmul.f32 %v811, 1.442695
        %v828 = vpow.pop %v827
        %v829 = vmul.f32 %v812, 1.442695
        %v830 = vpow.pop %v829
        %v831 = vmul.f32 %v813, 1.442695
        %v832 = vpow.pop %v831
        %v833 = vmul.f32 %v814, 1.442695
        %v834 = vpow.pop %v833
        %v835 = vmul.f32 %v815, 1.442695
        %v836 = vpow.pop %v835
        %v837 = vmul.f32 %v816, 1.442695
        %v838 = vpow.pop %v837
        %v839 = vmul.f32 %v817, 1.442695
        %v840 = vpow.pop %v839
        %v841 = vmul.f32 %v818, 1.442695
        %v842 = vpow.pop %v841
        %v843 = vmul.f32 %v819, 1.442695
        %v844 = vpow.pop %v843
        %v845 = vmul.f32 %v820, 1.442695
        %v846 = vpow.pop %v845
        %v847 = vmul.f32 %v821, 1.442695
        %v848 = vpow.pop %v847
        %v849 = vmul.f32 %v822, 1.442695
        %v850 = vpow.pop %v849
        %v851 = vmul.f32 %v823, 1.442695
        %v852 = vpow.pop %v851
        %v853 = vmul.f32 %v824, 1.442695
        %v854 = vpow.pop %v853
        %v855 = vmul.f32 %v825, 1.442695
        %v856 = vpow.pop %v855
        %v857 = vmul.f32 %v826, 1.442695
        %v858 = vpow.pop %v857
        %v859 = vmul.f32 %v779, %v828
        %v860 = vmul.f32 %v780, %v830
        %v861 = vmul.f32 %v781, %v832
        %v862 = vmul.f32 %v782, %v834
        %v863 = vmul.f32 %v783, %v836
        %v864 = vmul.f32 %v784, %v838
        %v865 = vmul.f32 %v785, %v840
        %v866 = vmul.f32 %v786, %v842
        %v867 = vmul.f32 %v787, %v844
        %v868 = vmul.f32 %v788, %v846
        %v869 = vmul.f32 %v789, %v848
        %v870 = vmul.f32 %v790, %v850
        %v871 = vmul.f32 %v791, %v852
        %v872 = vmul.f32 %v792, %v854
        %v873 = vmul.f32 %v793, %v856
        %v874 = vmul.f32 %v794, %v858
        %v875 = vsub.f32 1.0, %v859
        %v876 = vsub.f32 1.0, %v860
        %v877 = vsub.f32 1.0, %v861
        %v878 = vsub.f32 1.0, %v862
        %v879 = vsub.f32 1.0, %v863
        %v880 = vsub.f32 1.0, %v864
        %v881 = vsub.f32 1.0, %v865
        %v882 = vsub.f32 1.0, %v866
        %v883 = vsub.f32 1.0, %v867
        %v884 = vsub.f32 1.0, %v868
        %v885 = vsub.f32 1.0, %v869
        %v886 = vsub.f32 1.0, %v870
        %v887 = vsub.f32 1.0, %v871
        %v888 = vsub.f32 1.0, %v872
        %v889 = vsub.f32 1.0, %v873
        %v890 = vsub.f32 1.0, %v874
        %vm891 = vcmp.lt.f32.partialorder %v444, 0.0
        %vm892 = vcmp.lt.f32.partialorder %v446, 0.0
        %vm893 = vcmp.lt.f32.partialorder %v533, 0.0
        %vm894 = vcmp.lt.f32.partialorder %v535, 0.0
        %vm895 = vcmp.lt.f32.partialorder %v450, 0.0
        %vm896 = vcmp.lt.f32.partialorder %v452, 0.0
        %vm897 = vcmp.lt.f32.partialorder %v539, 0.0
        %vm898 = vcmp.lt.f32.partialorder %v541, 0.0
        %vm899 = vcmp.lt.f32.partialorder %v456, 0.0
        %vm900 = vcmp.lt.f32.partialorder %v458, 0.0
        %vm901 = vcmp.lt.f32.partialorder %v545, 0.0
        %vm902 = vcmp.lt.f32.partialorder %v547, 0.0
        %vm903 = vcmp.lt.f32.partialorder %v462, 0.0
        %vm904 = vcmp.lt.f32.partialorder %v464, 0.0
        %vm905 = vcmp.lt.f32.partialorder %v551, 0.0
        %vm906 = vcmp.lt.f32.partialorder %v553, 0.0
        %v907 = vsub.f32 0.0, %v875
        %v908 = vsub.f32 0.0, %v876
        %v909 = vsub.f32 0.0, %v877
        %v910 = vsub.f32 0.0, %v878
        %v911 = vsub.f32 0.0, %v879
        %v912 = vsub.f32 0.0, %v880
        %v913 = vsub.f32 0.0, %v881
        %v914 = vsub.f32 0.0, %v882
        %v915 = vsub.f32 0.0, %v883
        %v916 = vsub.f32 0.0, %v884
        %v917 = vsub.f32 0.0, %v885
        %v918 = vsub.f32 0.0, %v886
        %v919 = vsub.f32 0.0, %v887
        %v920 = vsub.f32 0.0, %v888
        %v921 = vsub.f32 0.0, %v889
        %v922 = vsub.f32 0.0, %v890
        %v923 = vsel %vm891, %v907, %v875
        %v924 = vsel %vm892, %v908, %v876
        %v925 = vsel %vm893, %v909, %v877
        %v926 = vsel %vm894, %v910, %v878
        %v927 = vsel %vm895, %v911, %v879
        %v928 = vsel %vm896, %v912, %v880
        %v929 = vsel %vm897, %v913, %v881
        %v930 = vsel %vm898, %v914, %v882
        %v931 = vsel %vm899, %v915, %v883
        %v932 = vsel %vm900, %v916, %v884
        %v933 = vsel %vm901, %v917, %v885
        %v934 = vsel %vm902, %v918, %v886
        %v935 = vsel %vm903, %v919, %v887
        %v936 = vsel %vm904, %v920, %v888
        %v937 = vsel %vm905, %v921, %v889
        %v938 = vsel %vm906, %v922, %v890
        %v939 = vmul.f32 %v444, 0.5
        %v940 = vmul.f32 %v446, 0.5
        %v941 = vmul.f32 %v533, 0.5
        %v942 = vmul.f32 %v535, 0.5
        %v943 = vmul.f32 %v450, 0.5
        %v944 = vmul.f32 %v452, 0.5
        %v945 = vmul.f32 %v539, 0.5
        %v946 = vmul.f32 %v541, 0.5
        %v947 = vmul.f32 %v456, 0.5
        %v948 = vmul.f32 %v458, 0.5
        %v949 = vmul.f32 %v545, 0.5
        %v950 = vmul.f32 %v547, 0.5
        %v951 = vmul.f32 %v462, 0.5
        %v952 = vmul.f32 %v464, 0.5
        %v953 = vmul.f32 %v551, 0.5
        %v954 = vmul.f32 %v553, 0.5
        %v955 = vadd.f32 %v923, 1.0
        %v956 = vadd.f32 %v924, 1.0
        %v957 = vadd.f32 %v925, 1.0
        %v958 = vadd.f32 %v926, 1.0
        %v959 = vadd.f32 %v927, 1.0
        %v960 = vadd.f32 %v928, 1.0
        %v961 = vadd.f32 %v929, 1.0
        %v962 = vadd.f32 %v930, 1.0
        %v963 = vadd.f32 %v931, 1.0
        %v964 = vadd.f32 %v932, 1.0
        %v965 = vadd.f32 %v933, 1.0
        %v966 = vadd.f32 %v934, 1.0
        %v967 = vadd.f32 %v935, 1.0
        %v968 = vadd.f32 %v936, 1.0
        %v969 = vadd.f32 %v937, 1.0
        %v970 = vadd.f32 %v938, 1.0
        %v971 = vmul.f32 %v939, %v955
        %v972 = vmul.f32 %v940, %v956
        %v973 = vmul.f32 %v941, %v957
        %v974 = vmul.f32 %v942, %v958
        %v975 = vmul.f32 %v943, %v959
        %v976 = vmul.f32 %v944, %v960
        %v977 = vmul.f32 %v945, %v961
        %v978 = vmul.f32 %v946, %v962
        %v979 = vmul.f32 %v947, %v963
        %v980 = vmul.f32 %v948, %v964
        %v981 = vmul.f32 %v949, %v965
        %v982 = vmul.f32 %v950, %v966
        %v983 = vmul.f32 %v951, %v967
        %v984 = vmul.f32 %v952, %v968
        %v985 = vmul.f32 %v953, %v969
        %v986 = vmul.f32 %v954, %v970
        %v987 = vld [vmem:[#allocation5] sm:$0xff]
        %v988 = vld [vmem:[#allocation5 + $0x8] sm:$0xff]
        %v989 = vld [vmem:[#allocation5 + $0x10] sm:$0xff]
        %v990 = vld [vmem:[#allocation5 + $0x18] sm:$0xff]
        %v991 = vld [vmem:[%s4] sm:$0xff]
        %v992 = vld [vmem:[%s4 + $0x8] sm:$0xff]
        %v993 = vld [vmem:[%s4 + $0x10] sm:$0xff]
        %v994 = vld [vmem:[%s4 + $0x18] sm:$0xff]
        %996 = vset.pattern.permute.xlu0 0
        %997 = vperm.xlu0 %996, %v991
        %v998 = vpop.permute.xlu0 %997
        %1001 = vset.pattern.permute.xlu0 0
        %1002 = vperm.xlu0 %1001, %v992
        %v1003 = vpop.permute.xlu0 %1002
        %1006 = vset.pattern.permute.xlu0 0
        %1007 = vperm.xlu0 %1006, %v993
        %v1008 = vpop.permute.xlu0 %1007
        %1011 = vset.pattern.permute.xlu0 0
        %1012 = vperm.xlu0 %1011, %v994
        %v1013 = vpop.permute.xlu0 %1012
        %vm1015 = vcmask 261120
        %v1017 = vsel %vm1015, %v987, 0
        %v1020 = vsel %vm1015, %v988, 0
        %v1023 = vsel %vm1015, %v989, 0
        %v1026 = vsel %vm1015, %v990, 0
        %1028 = vmatprep.subr.mxu0 %v972
        %1029 = vmatpush1.msra.mxu0 %v971
        %1030 = vmatprep.subr.mxu0 %v976
        %1031 = vmatpush1.msra.mxu0 %v975
        %1032 = vmatprep.subr.mxu0 %v980
        %1033 = vmatpush1.msra.mxu0 %v979
        %1034 = vmatprep.subr.mxu0 %v984
        %1035 = vmatpush1.msra.mxu0 %v983
        %1036 = vmatprep.subr.mxu0 0.0
        %1037 = vmatpush1.msra.mxu0 0.0
        %1038 = vmatprep.subr.mxu0 0.0
        %1039 = vmatpush1.msra.mxu0 0.0
        %1040 = vmatprep.subr.mxu0 0.0
        %1041 = vmatpush1.msra.mxu0 0.0
        %1042 = vmatprep.subr.mxu0 0.0
        %1043 = vmatpush1.msra.mxu0 0.0
        %1044 = vmatprep.subr.mxu0 0.0
        %1045 = vmatpush1.msra.mxu0 0.0
        %1046 = vmatprep.subr.mxu0 0.0
        %1047 = vmatpush1.msra.mxu0 0.0
        %1048 = vmatprep.subr.mxu0 0.0
        %1049 = vmatpush1.msra.mxu0 0.0
        %1050 = vmatprep.subr.mxu0 0.0
        %1051 = vmatpush1.msra.mxu0 0.0
        %1052 = vmatprep.subr.mxu0 0.0
        %1053 = vmatpush1.msra.mxu0 0.0
        %1054 = vmatprep.subr.mxu0 0.0
        %1055 = vmatpush1.msra.mxu0 0.0
        %1056 = vmatprep.subr.mxu0 0.0
        %1057 = vmatpush1.msra.mxu0 0.0
        %1058 = vmatprep.subr.mxu0 0.0
        %1059 = vmatpush1.msra.mxu0 0.0
        %1060 = vmatprep.subr.mxu0 0.0
        %1061 = vmatpush1.msra.mxu0 0.0
        %1062 = vmatprep.subr.mxu0 0.0
        %1063 = vmatpush1.msra.mxu0 0.0
        %1064 = vmatprep.subr.mxu0 0.0
        %1065 = vmatpush1.msra.mxu0 0.0
        %1066 = vmatprep.subr.mxu0 0.0
        %1067 = vmatpush1.msra.mxu0 0.0
        %1068 = vmatprep.subr.mxu0 0.0
        %1069 = vmatpush1.msra.mxu0 0.0
        %1070 = vmatprep.subr.mxu0 0.0
        %1071 = vmatpush1.msra.mxu0 0.0
        %1072 = vmatprep.subr.mxu0 0.0
        %1073 = vmatpush1.msra.mxu0 0.0
        %1074 = vmatprep.subr.mxu0 0.0
        %1075 = vmatpush1.msra.mxu0 0.0
        %1076 = vmatprep.subr.mxu0 0.0
        %1077 = vmatpush1.msra.mxu0 0.0
        %1078 = vmatprep.subr.mxu0 0.0
        %1079 = vmatpush1.msra.mxu0 0.0
        %1080 = vmatprep.subr.mxu0 0.0
        %1081 = vmatpush1.msra.mxu0 0.0
        %1082 = vmatprep.subr.mxu0 0.0
        %1083 = vmatpush1.msra.mxu0 0.0
        %1084 = vmatprep.subr.mxu0 0.0
        %1085 = vmatpush1.msra.mxu0 0.0
        %1086 = vmatprep.subr.mxu0 0.0
        %1087 = vmatpush1.msra.mxu0 0.0
        %1088 = vmatprep.subr.mxu0 0.0
        %1089 = vmatpush1.msra.mxu0 0.0
        %1090 = vmatprep.subr.mxu0 0.0
        %1091 = vmatpush1.msra.mxu0 0.0
        %1092 = vmatprep.mubr.f32.mxu0 0.0
        %1093 = vmatmul.mubr.f32.gmra.mrb[0].mxu0 %v1017
        %v1094 = vpop.f32.mrb[0].mxu0
        %v1095 = vadd.f32 %v998, %v1094
        %v1096 = vpop.f32.mrb[0].mxu0
        %v1097 = vadd.f32 %v998, %v1096
        %1098 = vmatprep.mubr.f32.mxu0 0.0
        %1099 = vmatmul.mubr.f32.gmra.mrb[0].mxu0 %v1020
        %v1100 = vpop.f32.mrb[0].mxu0
        %v1101 = vadd.f32 %v1003, %v1100
        %v1102 = vpop.f32.mrb[0].mxu0
        %v1103 = vadd.f32 %v1003, %v1102
        %1104 = vmatprep.mubr.f32.mxu0 0.0
        %1105 = vmatmul.mubr.f32.gmra.mrb[0].mxu0 %v1023
        %v1106 = vpop.f32.mrb[0].mxu0
        %v1107 = vadd.f32 %v1008, %v1106
        %v1108 = vpop.f32.mrb[0].mxu0
        %v1109 = vadd.f32 %v1008, %v1108
        %1110 = vmatprep.mubr.f32.mxu0 0.0
        %1111 = vmatmul.mubr.f32.gmra.mrb[0].mxu0 %v1026
        %v1112 = vpop.f32.mrb[0].mxu0
        %v1113 = vadd.f32 %v1013, %v1112
        %v1114 = vpop.f32.mrb[0].mxu0
        %v1115 = vadd.f32 %v1013, %v1114
        %1116 = vdwg.mxu0
        %1117 = vmatprep.subr.mxu0 %v974
        %1118 = vmatpush1.msra.mxu0 %v973
        %1119 = vmatprep.subr.mxu0 %v978
        %1120 = vmatpush1.msra.mxu0 %v977
        %1121 = vmatprep.subr.mxu0 %v982
        %1122 = vmatpush1.msra.mxu0 %v981
        %1123 = vmatprep.subr.mxu0 %v986
        %1124 = vmatpush1.msra.mxu0 %v985
        %1125 = vmatprep.subr.mxu0 0.0
        %1126 = vmatpush1.msra.mxu0 0.0
        %1127 = vmatprep.subr.mxu0 0.0
        %1128 = vmatpush1.msra.mxu0 0.0
        %1129 = vmatprep.subr.mxu0 0.0
        %1130 = vmatpush1.msra.mxu0 0.0
        %1131 = vmatprep.subr.mxu0 0.0
        %1132 = vmatpush1.msra.mxu0 0.0
        %1133 = vmatprep.subr.mxu0 0.0
        %1134 = vmatpush1.msra.mxu0 0.0
        %1135 = vmatprep.subr.mxu0 0.0
        %1136 = vmatpush1.msra.mxu0 0.0
        %1137 = vmatprep.subr.mxu0 0.0
        %1138 = vmatpush1.msra.mxu0 0.0
        %1139 = vmatprep.subr.mxu0 0.0
        %1140 = vmatpush1.msra.mxu0 0.0
        %1141 = vmatprep.subr.mxu0 0.0
        %1142 = vmatpush1.msra.mxu0 0.0
        %1143 = vmatprep.subr.mxu0 0.0
        %1144 = vmatpush1.msra.mxu0 0.0
        %1145 = vmatprep.subr.mxu0 0.0
        %1146 = vmatpush1.msra.mxu0 0.0
        %1147 = vmatprep.subr.mxu0 0.0
        %1148 = vmatpush1.msra.mxu0 0.0
        %1149 = vmatprep.subr.mxu0 0.0
        %1150 = vmatpush1.msra.mxu0 0.0
        %1151 = vmatprep.subr.mxu0 0.0
        %1152 = vmatpush1.msra.mxu0 0.0
        %1153 = vmatprep.subr.mxu0 0.0
        %1154 = vmatpush1.msra.mxu0 0.0
        %1155 = vmatprep.subr.mxu0 0.0
        %1156 = vmatpush1.msra.mxu0 0.0
        %1157 = vmatprep.subr.mxu0 0.0
        %1158 = vmatpush1.msra.mxu0 0.0
        %1159 = vmatprep.subr.mxu0 0.0
        %1160 = vmatpush1.msra.mxu0 0.0
        %1161 = vmatprep.subr.mxu0 0.0
        %1162 = vmatpush1.msra.mxu0 0.0
        %1163 = vmatprep.subr.mxu0 0.0
        %1164 = vmatpush1.msra.mxu0 0.0
        %1165 = vmatprep.subr.mxu0 0.0
        %1166 = vmatpush1.msra.mxu0 0.0
        %1167 = vmatprep.subr.mxu0 0.0
        %1168 = vmatpush1.msra.mxu0 0.0
        %1169 = vmatprep.subr.mxu0 0.0
        %1170 = vmatpush1.msra.mxu0 0.0
        %1171 = vmatprep.subr.mxu0 0.0
        %1172 = vmatpush1.msra.mxu0 0.0
        %1173 = vmatprep.subr.mxu0 0.0
        %1174 = vmatpush1.msra.mxu0 0.0
        %1175 = vmatprep.subr.mxu0 0.0
        %1176 = vmatpush1.msra.mxu0 0.0
        %1177 = vmatprep.subr.mxu0 0.0
        %1178 = vmatpush1.msra.mxu0 0.0
        %1179 = vmatprep.subr.mxu0 0.0
        %1180 = vmatpush1.msra.mxu0 0.0
        %1181 = vmatprep.mubr.f32.mxu0 0.0
        %1182 = vmatmul.mubr.f32.gmra.mrb[0].mxu0 %v1017
        %v1183 = vpop.f32.mrb[0].mxu0
        %v1184 = vadd.f32 %v998, %v1183
        %v1185 = vpop.f32.mrb[0].mxu0
        %v1186 = vadd.f32 %v998, %v1185
        %1187 = vmatprep.mubr.f32.mxu0 0.0
        %1188 = vmatmul.mubr.f32.gmra.mrb[0].mxu0 %v1020
        %v1189 = vpop.f32.mrb[0].mxu0
        %v1190 = vadd.f32 %v1003, %v1189
        %v1191 = vpop.f32.mrb[0].mxu0
        %v1192 = vadd.f32 %v1003, %v1191
        %1193 = vmatprep.mubr.f32.mxu0 0.0
        %1194 = vmatmul.mubr.f32.gmra.mrb[0].mxu0 %v1023
        %v1195 = vpop.f32.mrb[0].mxu0
        %v1196 = vadd.f32 %v1008, %v1195
        %v1197 = vpop.f32.mrb[0].mxu0
        %v1198 = vadd.f32 %v1008, %v1197
        %1199 = vmatprep.mubr.f32.mxu0 0.0
        %1200 = vmatmul.mubr.f32.gmra.mrb[0].mxu0 %v1026
        %v1201 = vpop.f32.mrb[0].mxu0
        %v1202 = vadd.f32 %v1013, %v1201
        %v1203 = vpop.f32.mrb[0].mxu0
        %v1204 = vadd.f32 %v1013, %v1203
        %1205 = vdwg.mxu0
        %1206 = vst [vmem:[%s257] sm:$0xff] %v1095
        %1207 = vst [vmem:[%s257 + $0x8] sm:$0xff] %v1097
        %1208 = vst [vmem:[%s257 + $0x10] sm:$0xff] %v1184
        %1209 = vst [vmem:[%s257 + $0x18] sm:$0xff] %v1186
        %1210 = vst [vmem:[%s257 + $0x20] sm:$0xff] %v1101
        %1211 = vst [vmem:[%s257 + $0x28] sm:$0xff] %v1103
        %1212 = vst [vmem:[%s257 + $0x30] sm:$0xff] %v1190
        %1213 = vst [vmem:[%s257 + $0x38] sm:$0xff] %v1192
        %1214 = vst [vmem:[%s257 + $0x40] sm:$0xff] %v1107
        %1215 = vst [vmem:[%s257 + $0x48] sm:$0xff] %v1109
        %1216 = vst [vmem:[%s257 + $0x50] sm:$0xff] %v1196
        %1217 = vst [vmem:[%s257 + $0x58] sm:$0xff] %v1198
        %1218 = vst [vmem:[%s257 + $0x60] sm:$0xff] %v1113
        %1219 = vst [vmem:[%s257 + $0x68] sm:$0xff] %v1115
        %1220 = vst [vmem:[%s257 + $0x70] sm:$0xff] %v1202
        %1221 = vst [vmem:[%s257 + $0x78] sm:$0xff] %v1204
        %s1222 = sand.u32 %s141, 1
        %s1223 = scalar_lea.sflag [#allocation4], %s1222
        %s1224 = sand.u32 %s141, 1
        %s1225 = smul.addr %s1224, 128
        %s1226 = scalar_lea.vmem [#allocation7], %s1225
        // Predicated region
        $region49: #{tpu_custom_call.1} parent=39 // pred_check
          %p1227 = pneg %p151
        $region50: #{tpu_custom_call.1} parent=39 // pred_check_branch
          %1229 = sbr.rel (%p1227) target = $region52
        $region51: #{tpu_custom_call.1} parent=39 // pred_region
          %s1230 = smul.u32 4, %s23
          %s1232 = ssub.s32 2048, 2048
          %1233 = vsyncadd %s1223, %s1232
          %s1234 = smul.addr %s1230, 128
          %s1235 = scalar_lea.hbm %s5, %s1234
          %s1236 = sshll.u32 %s1226, 4
          %s1237 = int_to_ptr.vmem [resolvable:$true] %s1236
          %1242 = dma.vmem_to_hbm [thread:$0]  %s1237, 2048, %s1235, %s1223, 512, 1024, 32
        $region52: #{tpu_custom_call.1} parent=39 // pred_fallthru
          _
      $region40: #{tpu_custom_call.1} parent=5 // pred_fallthru
        _
      %p1243 = scmp.le.s32.totalorder 2, %s18
      // Predicated region
      $region53: #{tpu_custom_call.1} parent=5 // pred_check
        %p1244 = pneg %p1243
      $region54: #{tpu_custom_call.1} parent=5 // pred_check_branch
        %1246 = sbr.rel (%p1244) target = $region56
      $region55: #{tpu_custom_call.1} parent=5 // pred_region
        %s1247 = ssub.s32 %s18, 2
        // Predicated region
        $region57: #{tpu_custom_call.1} parent=55 // pred_check
          %p1248 = pneg %p157
        $region58: #{tpu_custom_call.1} parent=55 // pred_check_branch
          %1250 = sbr.rel (%p1248) target = $region60
        $region59: #{tpu_custom_call.1} parent=55 // pred_region
          %s1251 = sand.u32 %s142, 1
          %s1252 = scalar_lea.sflag [#allocation4], %s1251
          %s1253 = sand.u32 %s142, 1
          %s1254 = smul.addr %s1253, 128
          %s1255 = scalar_lea.vmem [#allocation7], %s1254
          %1256 = dma.done %s1252, 2048
        $region60: #{tpu_custom_call.1} parent=55 // pred_fallthru
          _
      $region56: #{tpu_custom_call.1} parent=5 // pred_fallthru
        _
    $region6: #{tpu_custom_call.1} parent=1 // loop_footer
      %s22 = sadd.s32 1, %s18
    $region7: #{tpu_custom_call.1} parent=1 // loop_footer_branch
      %17 = sbr.rel target = $region3
    $region8: #{tpu_custom_call.1} parent=1 // loop_exit
      _
    %1257 = vsyncpa [#allocation3], 1
    %s1258 = scalar_lea.sflag [#allocation3], 1
    %1259 = vsyncpa %s1258, 1
    %1260 = vsyncpa [#allocation6], 1
    %1261 = vsyncpa [#allocation4], 1
    %s1262 = scalar_lea.sflag [#allocation4], 1
    %1263 = vsyncpa %s1262, 1

</llo_original>
